<compile_context>
chip_gen: v5e
topology: v5e:2x2
jax: 0.10.0
libtpu: 0.0.40
codegen_flags: <defaults>
</compile_context>

<pallas_src>
import jax
import jax.numpy as jnp
from jax.experimental import pallas as pl
from jax.experimental.pallas import tpu as pltpu

LANE = 128          # hidden dim is zero-padded to a multiple of this
MAX_TILE_ROWS = 1024  # cap on batch rows per grid step


def _round_up(x, m):
    return ((x + m - 1) // m) * m


# ----------------------------------------------------------------------------
# Kernel
# ----------------------------------------------------------------------------
def policy_kernel(x_ref, w1_ref, b1_ref, w2_ref, b2_ref,
                  w3_ref, b3_ref, wv_ref, bv_ref,
                  probs_ref, value_ref):
    """One batch tile of the MLP trunk + policy head (softmax) + value head."""
    x = x_ref[...]

    # linear1 + relu  (K = n_states, N = padded hidden = lane-dense)
    h1 = jnp.dot(x, w1_ref[...], preferred_element_type=jnp.float32) + b1_ref[...]
    h1 = jnp.maximum(h1, 0.0)

    # linear2 + relu  (K = N = 128-padded hidden)
    h2 = jnp.dot(h1, w2_ref[...], preferred_element_type=jnp.float32) + b2_ref[...]
    h2 = jnp.maximum(h2, 0.0)

    # value head -> narrow (tb, 1) output
    value_ref[...] = (
        jnp.dot(h2, wv_ref[...], preferred_element_type=jnp.float32) + bv_ref[...]
    )

    # policy head -> row-wise softmax over the n_output action logits.
    logits = jnp.dot(h2, w3_ref[...], preferred_element_type=jnp.float32) + b3_ref[...]
    m = jnp.max(logits, axis=-1, keepdims=True)
    e = jnp.exp(logits - m)
    denom = jnp.sum(e, axis=-1, keepdims=True)
    # Exact normalization (review: approx reciprocal can perturb sum(probs)==1).
    probs_ref[...] = e / denom


# ----------------------------------------------------------------------------
# Wrappers
# ----------------------------------------------------------------------------
def _pick_tile(batch):
    """Choose (tile_rows, padded_batch).

    - batch is padded only to a multiple of 8 (sublane) unless it is huge.
    - prefer 2 grid steps when the 8-aligned batch splits evenly (lets v7x put
      one step on each TensorCore); otherwise one tile covering everything.
    - very large batches stream in MAX_TILE_ROWS-row tiles.
    """
    b8 = _round_up(batch, 8)
    half = b8 // 2
    if b8 >= 16 and half % 8 == 0 and half <= MAX_TILE_ROWS:
        tb = half                     # exactly 2 grid steps, no extra padding
    elif b8 <= MAX_TILE_ROWS:
        tb = b8                       # single tile
    else:
        tb = MAX_TILE_ROWS
    return tb, _round_up(b8, tb)


def policy_forward_batched(xb, kparams):
    """xb: (B, n_states) f32. Returns (probs (B, n_output), values (B, 1)).

    Row-wise softmax over actions == PyTorch dim=0 softmax for each 1-D state.
    """
    (w1t, b1, w2t, b2, w3t, b3, wvt, bv, n_output) = kparams
    B, n_states = xb.shape
    h_pad = w1t.shape[1]

    tb, b_pad = _pick_tile(B)
    if b_pad != B:
        xb = jnp.pad(xb, ((0, b_pad - B), (0, 0)))
    grid = (b_pad // tb,)

    probs, values = pl.pallas_call(
        policy_kernel,
        out_shape=(
            jax.ShapeDtypeStruct((b_pad, n_output), jnp.float32),
            jax.ShapeDtypeStruct((b_pad, 1), jnp.float32),
        ),
        grid=grid,
        in_specs=[
            # Activations: one batch tile per grid step.
            pl.BlockSpec((tb, n_states), lambda i: (i, 0)),
            # Weights / biases: constant block index -> stay VMEM-resident.
            pl.BlockSpec((n_states, h_pad), lambda i: (0, 0)),
            pl.BlockSpec((1, h_pad), lambda i: (0, 0)),
            pl.BlockSpec((h_pad, h_pad), lambda i: (0, 0)),
            pl.BlockSpec((1, h_pad), lambda i: (0, 0)),
            pl.BlockSpec((h_pad, n_output), lambda i: (0, 0)),
            pl.BlockSpec((1, n_output), lambda i: (0, 0)),
            pl.BlockSpec((h_pad, 1), lambda i: (0, 0)),
            pl.BlockSpec((1, 1), lambda i: (0, 0)),
        ],
        out_specs=(
            pl.BlockSpec((tb, n_output), lambda i: (i, 0)),
            pl.BlockSpec((tb, 1), lambda i: (i, 0)),
        ),
        compiler_params=pltpu.CompilerParams(
            dimension_semantics=("parallel",),
        ),
    )(xb, w1t, b1, w2t, b2, w3t, b3, wvt, bv)

    if b_pad != B:
        probs = probs[:B]
        values = values[:B]
    return probs, values


def policy_forward(x, kparams):
    """Single-state forward matching the PyTorch module.

    x: (n_states,) f32. Returns (probs (n_output,), value (1,)).
    Note: at B=1 this path is launch/prologue dominated; for latency-critical
    single-state inference the pure-JAX reference under jit is equally good --
    the Pallas path is kept so the module forward itself runs in the kernel.
    """
    probs, values = policy_forward_batched(x.reshape(1, -1), kparams)
    return probs[0], values[0]


# ----------------------------------------------------------------------------
# Parameters
# ----------------------------------------------------------------------------
def init_params(key, n_states, n_hidden, n_output):
    """nn.init.normal_(w, 0, 0.01) for every Linear weight and bias.
    Weights are stored transposed: (in_features, out_features)."""
    ks = jax.random.split(key, 8)
    std = 0.01
    w1t = std * jax.random.normal(ks[0], (n_states, n_hidden), jnp.float32)
    b1 = std * jax.random.normal(ks[1], (n_hidden,), jnp.float32)
    w2t = std * jax.random.normal(ks[2], (n_hidden, n_hidden), jnp.float32)
    b2 = std * jax.random.normal(ks[3], (n_hidden,), jnp.float32)
    w3t = std * jax.random.normal(ks[4], (n_hidden, n_output), jnp.float32)
    b3 = std * jax.random.normal(ks[5], (n_output,), jnp.float32)
    wvt = std * jax.random.normal(ks[6], (n_hidden, 1), jnp.float32)
    bv = std * jax.random.normal(ks[7], (1,), jnp.float32)
    return (w1t, b1, w2t, b2, w3t, b3, wvt, bv)


def fuse_params(params):
    """One-time repack into kernel layout: hidden dim zero-padded to a multiple
    of 128 (lane-dense intermediates, K=128 contractions) and 2-D biases.
    Zero padding + ReLU(0)=0 keeps the math exactly equal to the unpadded net."""
    w1t, b1, w2t, b2, w3t, b3, wvt, bv = params
    n_hidden = w1t.shape[1]
    n_output = w3t.shape[1]
    h_pad = _round_up(n_hidden, LANE)
    dh = h_pad - n_hidden

    w1p = jnp.pad(w1t, ((0, 0), (0, dh)))
    b1p = jnp.pad(b1, ((0, dh),)).reshape(1, h_pad)
    w2p = jnp.pad(w2t, ((0, dh), (0, dh)))
    b2p = jnp.pad(b2, ((0, dh),)).reshape(1, h_pad)
    w3p = jnp.pad(w3t, ((0, dh), (0, 0)))
    b3p = b3.reshape(1, n_output)
    wvp = jnp.pad(wvt, ((0, dh), (0, 0)))
    bvp = bv.reshape(1, 1)
    return (w1p, b1p, w2p, b2p, w3p, b3p, wvp, bvp, n_output)


# ----------------------------------------------------------------------------
# Pure-JAX reference (mirrors the PyTorch forward)
# ----------------------------------------------------------------------------
def policy_forward_ref(x, params):
    w1t, b1, w2t, b2, w3t, b3, wvt, bv = params
    h1 = jnp.maximum(x @ w1t + b1, 0.0)
    h2 = jnp.maximum(h1 @ w2t + b2, 0.0)
    logits = h2 @ w3t + b3
    probs = jax.nn.softmax(logits, axis=0)   # dim=0 on the 1-D logits
    value = h2 @ wvt + bv
    return probs, value


if __name__ == "__main__":
    n_states, n_hidden, n_output = 16, 32, 8
    batch = 64            # tiles as 2 x 32-row grid steps, no padding
    batch_tail = 50       # exercises the 8-aligned tail-padding path

    key = jax.random.PRNGKey(0)
    k_param, k_x, k_xb = jax.random.split(key, 3)
    params = init_params(k_param, n_states, n_hidden, n_output)
    kparams = fuse_params(params)

    # --- single-state forward (exact PyTorch module semantics) ---------------
    x = jax.random.normal(k_x, (n_states,), jnp.float32)
    probs, value = policy_forward(x, kparams)
    jax.block_until_ready((probs, value))

    probs_ref, value_ref = policy_forward_ref(x, params)
    assert probs.shape == (n_output,) and value.shape == (1,)
    assert jnp.allclose(probs, probs_ref, atol=1e-5, rtol=1e-3)
    assert jnp.allclose(value, value_ref, atol=1e-5, rtol=1e-3)
    assert jnp.allclose(jnp.sum(probs), 1.0, atol=1e-5)

    # --- batched forward (MXU-filling path, 2 parallel grid steps) -----------
    xb = jax.random.normal(k_xb, (batch, n_states), jnp.float32)
    probs_b, values_b = policy_forward_batched(xb, kparams)
    jax.block_until_ready((probs_b, values_b))

    probs_b_ref, values_b_ref = jax.vmap(
        lambda xx: policy_forward_ref(xx, params))(xb)
    assert probs_b.shape == (batch, n_output)
    assert values_b.shape == (batch, 1)
    assert jnp.allclose(probs_b, probs_b_ref, atol=1e-5, rtol=1e-3)
    assert jnp.allclose(values_b, values_b_ref, atol=1e-5, rtol=1e-3)
    assert jnp.allclose(jnp.sum(probs_b, axis=-1), jnp.ones((batch,)), atol=1e-5)

    # --- batched forward with a non-multiple-of-8 batch (pad path) -----------
    xt = jax.random.normal(jax.random.PRNGKey(1), (batch_tail, n_states), jnp.float32)
    probs_t, values_t = policy_forward_batched(xt, kparams)
    jax.block_until_ready((probs_t, values_t))

    probs_t_ref, values_t_ref = jax.vmap(
        lambda xx: policy_forward_ref(xx, params))(xt)
    assert probs_t.shape == (batch_tail, n_output)
    assert values_t.shape == (batch_tail, 1)
    assert jnp.allclose(probs_t, probs_t_ref, atol=1e-5, rtol=1e-3)
    assert jnp.allclose(values_t, values_t_ref, atol=1e-5, rtol=1e-3)

    # TODO(synk): the module's training-side bookkeeping (reward / log_act_probs /
    # Gt / sigma lists, Categorical sampling, optimizer, clip_grad_norm_) is
    # host-side logic with no Pallas equivalent; only the forward pass is here.
    print("KERNEL_OK")
</pallas_src>

<mosaic_0001>
module attributes {stable_mosaic.version = 11 : i64} {
  func.func @policy_kernel(%arg0: i32, %arg1: memref<8x16xf32, #tpu.memory_space<vmem>>, %arg2: memref<16x128xf32, #tpu.memory_space<vmem>>, %arg3: memref<1x128xf32, #tpu.memory_space<vmem>>, %arg4: memref<128x128xf32, #tpu.memory_space<vmem>>, %arg5: memref<1x128xf32, #tpu.memory_space<vmem>>, %arg6: memref<128x8xf32, #tpu.memory_space<vmem>>, %arg7: memref<1x8xf32, #tpu.memory_space<vmem>>, %arg8: memref<128x1xf32, #tpu.memory_space<vmem>>, %arg9: memref<1x1xf32, #tpu.memory_space<vmem>>, %arg10: memref<8x8xf32, #tpu.memory_space<vmem>>, %arg11: memref<8x1xf32, #tpu.memory_space<vmem>>) attributes {dimension_semantics = [#tpu.dimension_semantics<parallel>], iteration_bounds = array<i64: 1>, scalar_prefetch = 0 : i64, scratch_operands = 0 : i64, tpu.core_type = #tpu.core_type<tc>, window_params = [{transform_indices = @transform_0, window_bounds = array<i64: 8, 16>}, {pipeline_mode = #tpu.pipeline_mode<synchronous>, transform_indices = @transform_1, window_bounds = array<i64: 16, 128>}, {pipeline_mode = #tpu.pipeline_mode<synchronous>, transform_indices = @transform_2, window_bounds = array<i64: 1, 128>}, {pipeline_mode = #tpu.pipeline_mode<synchronous>, transform_indices = @transform_3, window_bounds = array<i64: 128, 128>}, {pipeline_mode = #tpu.pipeline_mode<synchronous>, transform_indices = @transform_4, window_bounds = array<i64: 1, 128>}, {pipeline_mode = #tpu.pipeline_mode<synchronous>, transform_indices = @transform_5, window_bounds = array<i64: 128, 8>}, {pipeline_mode = #tpu.pipeline_mode<synchronous>, transform_indices = @transform_6, window_bounds = array<i64: 1, 8>}, {pipeline_mode = #tpu.pipeline_mode<synchronous>, transform_indices = @transform_7, window_bounds = array<i64: 128, 1>}, {pipeline_mode = #tpu.pipeline_mode<synchronous>, transform_indices = @transform_8, window_bounds = array<i64: 1, 1>}, {transform_indices = @transform_9, window_bounds = array<i64: 8, 8>}, {transform_indices = @transform_10, window_bounds = array<i64: 8, 1>}]} {
    %c0 = arith.constant 0 : index
    %c0_0 = arith.constant 0 : index
    %0 = vector.load %arg1[%c0, %c0_0] : memref<8x16xf32, #tpu.memory_space<vmem>>, vector<8x16xf32>
    %c0_1 = arith.constant 0 : index
    %c0_2 = arith.constant 0 : index
    %1 = vector.load %arg2[%c0_1, %c0_2] : memref<16x128xf32, #tpu.memory_space<vmem>>, vector<16x128xf32>
    %cst = arith.constant dense<0.000000e+00> : vector<8x128xf32>
    %2 = tpu.matmul %0, %1, %cst {dimension_numbers = #tpu.dot_dimension_numbers<[1], [0], [0], [1], [0, 0, 1, 1], [], []>} : vector<8x16xf32>, vector<16x128xf32>, vector<8x128xf32> -> vector<8x128xf32>
    %c0_3 = arith.constant 0 : index
    %c0_4 = arith.constant 0 : index
    %3 = vector.load %arg3[%c0_3, %c0_4] : memref<1x128xf32, #tpu.memory_space<vmem>>, vector<1x128xf32>
    %4 = vector.broadcast %3 : vector<1x128xf32> to vector<8x128xf32>
    %5 = arith.addf %2, %4 : vector<8x128xf32>
    %cst_5 = arith.constant 0.000000e+00 : f32
    %6 = vector.broadcast %cst_5 : f32 to vector<8x128xf32>
    %7 = arith.maximumf %5, %6 : vector<8x128xf32>
    %c0_6 = arith.constant 0 : index
    %c0_7 = arith.constant 0 : index
    %8 = vector.load %arg4[%c0_6, %c0_7] : memref<128x128xf32, #tpu.memory_space<vmem>>, vector<128x128xf32>
    %cst_8 = arith.constant dense<0.000000e+00> : vector<8x128xf32>
    %9 = tpu.matmul %7, %8, %cst_8 {dimension_numbers = #tpu.dot_dimension_numbers<[1], [0], [0], [1], [0, 0, 1, 1], [], []>} : vector<8x128xf32>, vector<128x128xf32>, vector<8x128xf32> -> vector<8x128xf32>
    %c0_9 = arith.constant 0 : index
    %c0_10 = arith.constant 0 : index
    %10 = vector.load %arg5[%c0_9, %c0_10] : memref<1x128xf32, #tpu.memory_space<vmem>>, vector<1x128xf32>
    %11 = vector.broadcast %10 : vector<1x128xf32> to vector<8x128xf32>
    %12 = arith.addf %9, %11 : vector<8x128xf32>
    %cst_11 = arith.constant 0.000000e+00 : f32
    %13 = vector.broadcast %cst_11 : f32 to vector<8x128xf32>
    %14 = arith.maximumf %12, %13 : vector<8x128xf32>
    %c0_12 = arith.constant 0 : index
    %c0_13 = arith.constant 0 : index
    %15 = vector.load %arg8[%c0_12, %c0_13] : memref<128x1xf32, #tpu.memory_space<vmem>>, vector<128x1xf32>
    %cst_14 = arith.constant dense<0.000000e+00> : vector<8x1xf32>
    %16 = tpu.matmul %14, %15, %cst_14 {dimension_numbers = #tpu.dot_dimension_numbers<[1], [0], [0], [1], [0, 0, 1, 1], [], []>} : vector<8x128xf32>, vector<128x1xf32>, vector<8x1xf32> -> vector<8x1xf32>
    %c0_15 = arith.constant 0 : index
    %c0_16 = arith.constant 0 : index
    %17 = vector.load %arg9[%c0_15, %c0_16] : memref<1x1xf32, #tpu.memory_space<vmem>>, vector<1x1xf32>
    %18 = vector.broadcast %17 : vector<1x1xf32> to vector<8x1xf32>
    %19 = arith.addf %16, %18 : vector<8x1xf32>
    %c0_17 = arith.constant 0 : index
    %c0_18 = arith.constant 0 : index
    %20 = vector.load %arg11[%c0_17, %c0_18] : memref<8x1xf32, #tpu.memory_space<vmem>>, vector<8x1xf32>
    tpu.vector_store %arg11[%c0_17, %c0_18], %19 {strides = array<i32>} : memref<8x1xf32, #tpu.memory_space<vmem>>, vector<8x1xf32>,
    %c0_19 = arith.constant 0 : index
    %c0_20 = arith.constant 0 : index
    %21 = vector.load %arg6[%c0_19, %c0_20] : memref<128x8xf32, #tpu.memory_space<vmem>>, vector<128x8xf32>
    %cst_21 = arith.constant dense<0.000000e+00> : vector<8x8xf32>
    %22 = tpu.matmul %14, %21, %cst_21 {dimension_numbers = #tpu.dot_dimension_numbers<[1], [0], [0], [1], [0, 0, 1, 1], [], []>} : vector<8x128xf32>, vector<128x8xf32>, vector<8x8xf32> -> vector<8x8xf32>
    %c0_22 = arith.constant 0 : index
    %c0_23 = arith.constant 0 : index
    %23 = vector.load %arg7[%c0_22, %c0_23] : memref<1x8xf32, #tpu.memory_space<vmem>>, vector<1x8xf32>
    %24 = vector.broadcast %23 : vector<1x8xf32> to vector<8x8xf32>
    %25 = arith.addf %22, %24 : vector<8x8xf32>
    %cst_24 = arith.constant dense<0xFF800000> : vector<8xf32>
    %26 = vector.multi_reduction <maximumf>, %25, %cst_24 [1] : vector<8x8xf32> to vector<8xf32>
    %27 = vector.shape_cast %26 : vector<8xf32> to vector<8x1xf32>
    %28 = vector.broadcast %27 : vector<8x1xf32> to vector<8x8xf32>
    %29 = arith.subf %25, %28 : vector<8x8xf32>
    %30 = math.exp %29 : vector<8x8xf32>
    %cst_25 = arith.constant dense<0.000000e+00> : vector<8xf32>
    %31 = vector.multi_reduction <add>, %30, %cst_25 [1] : vector<8x8xf32> to vector<8xf32>
    %32 = vector.shape_cast %31 : vector<8xf32> to vector<8x1xf32>
    %33 = vector.broadcast %32 : vector<8x1xf32> to vector<8x8xf32>
    %34 = arith.divf %30, %33 : vector<8x8xf32>
    %c0_26 = arith.constant 0 : index
    %c0_27 = arith.constant 0 : index
    %35 = vector.load %arg10[%c0_26, %c0_27] : memref<8x8xf32, #tpu.memory_space<vmem>>, vector<8x8xf32>
    tpu.vector_store %arg10[%c0_26, %c0_27], %34 {strides = array<i32>} : memref<8x8xf32, #tpu.memory_space<vmem>>, vector<8x8xf32>,
    return
  }
  func.func @transform_0(%arg0: i32) -> (i32, i32) {
    %c0_i32 = arith.constant 0 : i32
    %c0_i32_0 = arith.constant 0 : i32
    return %arg0, %c0_i32 : i32, i32
  }
  func.func @transform_1(%arg0: i32) -> (i32, i32) {
    %c0_i32 = arith.constant 0 : i32
    %c0_i32_0 = arith.constant 0 : i32
    %c0_i32_1 = arith.constant 0 : i32
    return %c0_i32, %c0_i32_0 : i32, i32
  }
  func.func @transform_2(%arg0: i32) -> (i32, i32) {
    %c0_i32 = arith.constant 0 : i32
    %c0_i32_0 = arith.constant 0 : i32
    %c0_i32_1 = arith.constant 0 : i32
    return %c0_i32, %c0_i32_0 : i32, i32
  }
  func.func @transform_3(%arg0: i32) -> (i32, i32) {
    %c0_i32 = arith.constant 0 : i32
    %c0_i32_0 = arith.constant 0 : i32
    %c0_i32_1 = arith.constant 0 : i32
    return %c0_i32, %c0_i32_0 : i32, i32
  }
  func.func @transform_4(%arg0: i32) -> (i32, i32) {
    %c0_i32 = arith.constant 0 : i32
    %c0_i32_0 = arith.constant 0 : i32
    %c0_i32_1 = arith.constant 0 : i32
    return %c0_i32, %c0_i32_0 : i32, i32
  }
  func.func @transform_5(%arg0: i32) -> (i32, i32) {
    %c0_i32 = arith.constant 0 : i32
    %c0_i32_0 = arith.constant 0 : i32
    %c0_i32_1 = arith.constant 0 : i32
    return %c0_i32, %c0_i32_0 : i32, i32
  }
  func.func @transform_6(%arg0: i32) -> (i32, i32) {
    %c0_i32 = arith.constant 0 : i32
    %c0_i32_0 = arith.constant 0 : i32
    %c0_i32_1 = arith.constant 0 : i32
    return %c0_i32, %c0_i32_0 : i32, i32
  }
  func.func @transform_7(%arg0: i32) -> (i32, i32) {
    %c0_i32 = arith.constant 0 : i32
    %c0_i32_0 = arith.constant 0 : i32
    %c0_i32_1 = arith.constant 0 : i32
    return %c0_i32, %c0_i32_0 : i32, i32
  }
  func.func @transform_8(%arg0: i32) -> (i32, i32) {
    %c0_i32 = arith.constant 0 : i32
    %c0_i32_0 = arith.constant 0 : i32
    %c0_i32_1 = arith.constant 0 : i32
    return %c0_i32, %c0_i32_0 : i32, i32
  }
  func.func @transform_9(%arg0: i32) -> (i32, i32) {
    %c0_i32 = arith.constant 0 : i32
    %c0_i32_0 = arith.constant 0 : i32
    return %arg0, %c0_i32 : i32, i32
  }
  func.func @transform_10(%arg0: i32) -> (i32, i32) {
    %c0_i32 = arith.constant 0 : i32
    %c0_i32_0 = arith.constant 0 : i32
    return %arg0, %c0_i32 : i32, i32
  }
}

</mosaic_0001>

<llo_original>
// kernel: tpu_custom_call.1
$region0: #{tpu_custom_call.1}
  #allocation0 [shape = 'u32[]', space=smem, size = 0x4, offset = 0x4, fixed_abs, tag = 'smem constant byte address 0x4 - core index']
  #allocation1 [shape = 'u32[72,128]{1,0:T(1,128)}', space=vmem, size = 0x9000, scoped, tag = 'internal scratch']
  #allocation2 [shape = 'f32[1,1]{1,0:T(1,128)S(1)}', space=vmem, size = 0x200, scoped, tag = 'scoped memory for tpu_custom_call.1']
  %s0 = inlined_call_operand.vmem [shape: f32[8,16], index: 0, kind: input, shape index: {}]
  %s1 = inlined_call_operand.vmem [shape: f32[16,128], index: 1, kind: input, shape index: {}]
  %s2 = inlined_call_operand.vmem [shape: f32[1,128], index: 2, kind: input, shape index: {}]
  %s3 = inlined_call_operand.vmem [shape: f32[128,128], index: 3, kind: input, shape index: {}]
  %s4 = inlined_call_operand.vmem [shape: f32[1,128], index: 4, kind: input, shape index: {}]
  %s5 = inlined_call_operand.vmem [shape: f32[128,8], index: 5, kind: input, shape index: {}]
  %s6 = inlined_call_operand.vmem [shape: f32[1,8], index: 6, kind: input, shape index: {}]
  %s7 = inlined_call_operand.vmem [shape: f32[128,1], index: 7, kind: input, shape index: {}]
  %s8 = inlined_call_operand.<no memory space> [shape: f32[1,1], index: 8, kind: input, shape index: {}]
  %s9 = inlined_call_operand.hbm [shape: f32[8,8], index: 9, kind: output, shape index: {0}]
  %s10 = inlined_call_operand.vmem [shape: f32[8,1], index: 10, kind: output, shape index: {1}]
  %11 = xla_tuple %s9, %s10
  %s12 = sld [smem:[#allocation0]]
  $region54: #{tpu_custom_call.1} parent=0
    _
  %s14 = ssub.s32 1, %s12
  %s15 = scalar_select 0, %s14, %s12
  %v16 = vstv %s8
  %17 = vst [vmem:[#allocation2] sm:$0x1] %v16
  $region1: #{tpu_custom_call.1} parent=0
    #allocation3 [shape = 'u8[4096]{0}', space=vmem, size = 0x1000, scoped, tag = 'output window, operand 0, single buffered']
    #allocation4 [shape = 's32[1]{0}', space=sflag, size = 0x4, scoped, tag = 'scoped memory for tpu_custom_call.1']
    %18 = vsyncpa [#allocation4], 0
    // Predicated region
    $region2: #{tpu_custom_call.1} parent=1 // pred_check
      _
    $region3: #{tpu_custom_call.1} parent=1 // pred_check_branch
      %20 = sbr.rel (0) target = $region5
    $region4: #{tpu_custom_call.1} parent=1 // pred_region
      _
    $region5: #{tpu_custom_call.1} parent=1 // pred_fallthru
      _
    // Predicated region
    $region6: #{tpu_custom_call.1} parent=1 // pred_check
      _
    $region7: #{tpu_custom_call.1} parent=1 // pred_check_branch
      %22 = sbr.rel (0) target = $region9
    $region8: #{tpu_custom_call.1} parent=1 // pred_region
      _
    $region9: #{tpu_custom_call.1} parent=1 // pred_fallthru
      _
    // Predicated region
    $region10: #{tpu_custom_call.1} parent=1 // pred_check
      _
    $region11: #{tpu_custom_call.1} parent=1 // pred_check_branch
      %24 = sbr.rel (0) target = $region13
    $region12: #{tpu_custom_call.1} parent=1 // pred_region
      _
    $region13: #{tpu_custom_call.1} parent=1 // pred_fallthru
      _
    // Predicated region
    $region14: #{tpu_custom_call.1} parent=1 // pred_check
      _
    $region15: #{tpu_custom_call.1} parent=1 // pred_check_branch
      %26 = sbr.rel (0) target = $region17
    $region16: #{tpu_custom_call.1} parent=1 // pred_region
      _
    $region17: #{tpu_custom_call.1} parent=1 // pred_fallthru
      _
    // Predicated region
    $region18: #{tpu_custom_call.1} parent=1 // pred_check
      _
    $region19: #{tpu_custom_call.1} parent=1 // pred_check_branch
      %28 = sbr.rel (0) target = $region21
    $region20: #{tpu_custom_call.1} parent=1 // pred_region
      _
    $region21: #{tpu_custom_call.1} parent=1 // pred_fallthru
      _
    // Predicated region
    $region22: #{tpu_custom_call.1} parent=1 // pred_check
      _
    $region23: #{tpu_custom_call.1} parent=1 // pred_check_branch
      %30 = sbr.rel (0) target = $region25
    $region24: #{tpu_custom_call.1} parent=1 // pred_region
      _
    $region25: #{tpu_custom_call.1} parent=1 // pred_fallthru
      _
    // Predicated region
    $region26: #{tpu_custom_call.1} parent=1 // pred_check
      _
    $region27: #{tpu_custom_call.1} parent=1 // pred_check_branch
      %32 = sbr.rel (0) target = $region29
    $region28: #{tpu_custom_call.1} parent=1 // pred_region
      _
    $region29: #{tpu_custom_call.1} parent=1 // pred_fallthru
      _
    // Predicated region
    $region30: #{tpu_custom_call.1} parent=1 // pred_check
      _
    $region31: #{tpu_custom_call.1} parent=1 // pred_check_branch
      %34 = sbr.rel (0) target = $region33
    $region32: #{tpu_custom_call.1} parent=1 // pred_region
      _
    $region33: #{tpu_custom_call.1} parent=1 // pred_fallthru
      _
    // Predicated region
    $region34: #{tpu_custom_call.1} parent=1 // pred_check
      _
    $region35: #{tpu_custom_call.1} parent=1 // pred_check_branch
      %36 = sbr.rel (0) target = $region37
    $region36: #{tpu_custom_call.1} parent=1 // pred_region
      _
    $region37: #{tpu_custom_call.1} parent=1 // pred_fallthru
      _
    %v37 = vld [vmem:[%s0] sm:$0xff]
    %v38 = vld [vmem:[%s1] sm:$0xff]
    %v39 = vld [vmem:[%s1 + $0x8] sm:$0xff]
    %v40 = vld [vmem:[%s2] sm:$0x1]
    %v42 = vperm.slane %v40, 0
    %vm44 = vcmask 130048
    %v46 = vsel %vm44, %v37, 0
    %48 = vmatpush.msra.mxu0 0.0
    %49 = vmatpush.msra.mxu0 0.0
    %50 = vmatpush.msra.mxu0 0.0
    %51 = vmatpush.msra.mxu0 0.0
    %52 = vmatpush.msra.mxu0 0.0
    %53 = vmatpush.msra.mxu0 0.0
    %54 = vmatpush.msra.mxu0 0.0
    %55 = vmatpush.msra.mxu0 0.0
    %56 = vmatpush.msra.mxu0 0.0
    %57 = vmatpush.msra.mxu0 0.0
    %58 = vmatpush.msra.mxu0 0.0
    %59 = vmatpush.msra.mxu0 0.0
    %60 = vmatpush.msra.mxu0 0.0
    %61 = vmatpush.msra.mxu0 0.0
    %62 = vmatpush.msra.mxu0 %v39
    %63 = vmatpush.msra.mxu0 %v38
    %64 = vmatmul.f32.gmra.mxu0 %v46
    %v65 = vpop.f32.mrf.mxu0
    %v66 = vadd.f32 %v42, %v65
    %67 = vdwg.mxu0
    %v68 = vmax.f32 %v66, 0.0
    %v69 = vld [vmem:[%s3] sm:$0xff]
    %v70 = vld [vmem:[%s3 + $0x8] sm:$0xff]
    %v71 = vld [vmem:[%s3 + $0x10] sm:$0xff]
    %v72 = vld [vmem:[%s3 + $0x18] sm:$0xff]
    %v73 = vld [vmem:[%s3 + $0x20] sm:$0xff]
    %v74 = vld [vmem:[%s3 + $0x28] sm:$0xff]
    %v75 = vld [vmem:[%s3 + $0x30] sm:$0xff]
    %v76 = vld [vmem:[%s3 + $0x38] sm:$0xff]
    %v77 = vld [vmem:[%s3 + $0x40] sm:$0xff]
    %v78 = vld [vmem:[%s3 + $0x48] sm:$0xff]
    %v79 = vld [vmem:[%s3 + $0x50] sm:$0xff]
    %v80 = vld [vmem:[%s3 + $0x58] sm:$0xff]
    %v81 = vld [vmem:[%s3 + $0x60] sm:$0xff]
    %v82 = vld [vmem:[%s3 + $0x68] sm:$0xff]
    %v83 = vld [vmem:[%s3 + $0x70] sm:$0xff]
    %v84 = vld [vmem:[%s3 + $0x78] sm:$0xff]
    %v85 = vld [vmem:[%s4] sm:$0x1]
    %v87 = vperm.slane %v85, 0
    %89 = vmatpush.msra.mxu0 %v84
    %90 = vmatpush.msra.mxu0 %v83
    %91 = vmatpush.msra.mxu0 %v82
    %92 = vmatpush.msra.mxu0 %v81
    %93 = vmatpush.msra.mxu0 %v80
    %94 = vmatpush.msra.mxu0 %v79
    %95 = vmatpush.msra.mxu0 %v78
    %96 = vmatpush.msra.mxu0 %v77
    %97 = vmatpush.msra.mxu0 %v76
    %98 = vmatpush.msra.mxu0 %v75
    %99 = vmatpush.msra.mxu0 %v74
    %100 = vmatpush.msra.mxu0 %v73
    %101 = vmatpush.msra.mxu0 %v72
    %102 = vmatpush.msra.mxu0 %v71
    %103 = vmatpush.msra.mxu0 %v70
    %104 = vmatpush.msra.mxu0 %v69
    %105 = vmatmul.f32.gmra.mxu0 %v68
    %v106 = vpop.f32.mrf.mxu0
    %v107 = vadd.f32 %v87, %v106
    %108 = vdwg.mxu0
    %v109 = vmax.f32 %v107, 0.0
    %v110 = vld [vmem:[%s7] sm:$0xff]
    %v111 = vld [vmem:[%s7 + $0x8] sm:$0xff]
    %v112 = vld [vmem:[%s7 + $0x10] sm:$0xff]
    %v113 = vld [vmem:[%s7 + $0x18] sm:$0xff]
    %v114 = vld [vmem:[%s7 + $0x20] sm:$0xff]
    %v115 = vld [vmem:[%s7 + $0x28] sm:$0xff]
    %v116 = vld [vmem:[%s7 + $0x30] sm:$0xff]
    %v117 = vld [vmem:[%s7 + $0x38] sm:$0xff]
    %v118 = vld [vmem:[%s7 + $0x40] sm:$0xff]
    %v119 = vld [vmem:[%s7 + $0x48] sm:$0xff]
    %v120 = vld [vmem:[%s7 + $0x50] sm:$0xff]
    %v121 = vld [vmem:[%s7 + $0x58] sm:$0xff]
    %v122 = vld [vmem:[%s7 + $0x60] sm:$0xff]
    %v123 = vld [vmem:[%s7 + $0x68] sm:$0xff]
    %v124 = vld [vmem:[%s7 + $0x70] sm:$0xff]
    %v125 = vld [vmem:[%s7 + $0x78] sm:$0xff]
    %v126 = vld [vmem:[#allocation2] sm:$0x1]
    %v128 = vperm.slane %v126, 0
    %130 = vmatpush.msra.mxu0 %v125
    %131 = vmatpush.msra.mxu0 %v124
    %132 = vmatpush.msra.mxu0 %v123
    %133 = vmatpush.msra.mxu0 %v122
    %134 = vmatpush.msra.mxu0 %v121
    %135 = vmatpush.msra.mxu0 %v120
    %136 = vmatpush.msra.mxu0 %v119
    %137 = vmatpush.msra.mxu0 %v118
    %138 = vmatpush.msra.mxu0 %v117
    %139 = vmatpush.msra.mxu0 %v116
    %140 = vmatpush.msra.mxu0 %v115
    %141 = vmatpush.msra.mxu0 %v114
    %142 = vmatpush.msra.mxu0 %v113
    %143 = vmatpush.msra.mxu0 %v112
    %144 = vmatpush.msra.mxu0 %v111
    %145 = vmatpush.msra.mxu0 %v110
    %146 = vmatmul.f32.gmra.mxu0 %v109
    %v147 = vpop.f32.mrf.mxu0
    %v148 = vadd.f32 %v128, %v147
    %149 = vdwg.mxu0
    %vm150 = vcmask 7168
    %151 = vst.msk [vmem:[%s10] sm:$0xff] %vm150, %v148
    %v152 = vld [vmem:[%s5] sm:$0xff]
    %v153 = vld [vmem:[%s5 + $0x8] sm:$0xff]
    %v154 = vld [vmem:[%s5 + $0x10] sm:$0xff]
    %v155 = vld [vmem:[%s5 + $0x18] sm:$0xff]
    %v156 = vld [vmem:[%s5 + $0x20] sm:$0xff]
    %v157 = vld [vmem:[%s5 + $0x28] sm:$0xff]
    %v158 = vld [vmem:[%s5 + $0x30] sm:$0xff]
    %v159 = vld [vmem:[%s5 + $0x38] sm:$0xff]
    %v160 = vld [vmem:[%s5 + $0x40] sm:$0xff]
    %v161 = vld [vmem:[%s5 + $0x48] sm:$0xff]
    %v162 = vld [vmem:[%s5 + $0x50] sm:$0xff]
    %v163 = vld [vmem:[%s5 + $0x58] sm:$0xff]
    %v164 = vld [vmem:[%s5 + $0x60] sm:$0xff]
    %v165 = vld [vmem:[%s5 + $0x68] sm:$0xff]
    %v166 = vld [vmem:[%s5 + $0x70] sm:$0xff]
    %v167 = vld [vmem:[%s5 + $0x78] sm:$0xff]
    %v168 = vld [vmem:[%s6] sm:$0x1]
    %v170 = vperm.slane %v168, 0
    %172 = vmatpush.msra.mxu0 %v167
    %173 = vmatpush.msra.mxu0 %v166
    %174 = vmatpush.msra.mxu0 %v165
    %175 = vmatpush.msra.mxu0 %v164
    %176 = vmatpush.msra.mxu0 %v163
    %177 = vmatpush.msra.mxu0 %v162
    %178 = vmatpush.msra.mxu0 %v161
    %179 = vmatpush.msra.mxu0 %v160
    %180 = vmatpush.msra.mxu0 %v159
    %181 = vmatpush.msra.mxu0 %v158
    %182 = vmatpush.msra.mxu0 %v157
    %183 = vmatpush.msra.mxu0 %v156
    %184 = vmatpush.msra.mxu0 %v155
    %185 = vmatpush.msra.mxu0 %v154
    %186 = vmatpush.msra.mxu0 %v153
    %187 = vmatpush.msra.mxu0 %v152
    %188 = vmatmul.f32.gmra.mxu0 %v109
    %v189 = vpop.f32.mrf.mxu0
    %v190 = vadd.f32 %v170, %v189
    %191 = vdwg.mxu0
    %vm192 = vcmask 64512
    %v193 = vsel %vm192, %v190, -inf
    %194 = vmax.xlane.f32.xlu0 %v193
    %v195 = vpop.xlane.xlu0 %194
    %v196 = vsub.f32 %v190, %v195
    %v197 = vmul.f32 %v196, 1.442695
    %v198 = vpow.pop %v197
    %v199 = vsel %vm192, %v198, 0.0
    %200 = vadd.xlane.f32.xlu0 %v199
    %v201 = vpop.xlane.xlu0 %200
    %v202 = vrcp.pop %v201
    %v203 = vmul.f32 %v201, %v202
    %v204 = vsub.f32 1.0, %v203
    %v205 = vmul.f32 %v202, %v204
    %v206 = vadd.f32 %v202, %v205
    %vm207 = vweird.f32 %v201
    %vm208 = vweird.f32 %v202
    %vm209 = vmor %vm207, %vm208
    %v210 = vsel %vm209, %v202, %v206
    %v211 = vand.u32 2147483647, %v201
    %vm212 = vcmp.eq.f32.partialorder %v211, 8.507059e+37
    %v213 = vand.u32 %v201, 2147483648
    %v214 = vor.u32 1.1754944e-38, %v213
    %v215 = vsel %vm212, %v214, %v210
    %v216 = vmul.f32 %v198, %v215
    %217 = vst.msk [vmem:[#allocation3] sm:$0xff] %vm192, %v216
    // Predicated region
    $region38: #{tpu_custom_call.1} parent=1 // pred_check
      _
    $region39: #{tpu_custom_call.1} parent=1 // pred_check_branch
      %219 = sbr.rel (0) target = $region41
    $region40: #{tpu_custom_call.1} parent=1 // pred_region
      %221 = vsyncadd [#allocation4], 0
      %s223 = sshll.u32 [#allocation3], 4
      %s224 = int_to_ptr.vmem [resolvable:$true] %s223
      %s225 = sshll.u32 %s9, 4
      %s226 = int_to_ptr.hbm [resolvable:$true] %s225
      %228 = dma.vmem_to_hbm [thread:$0]  %s224, 128, %s226, [#allocation4]
    $region41: #{tpu_custom_call.1} parent=1 // pred_fallthru
      _
    // Predicated region
    $region42: #{tpu_custom_call.1} parent=1 // pred_check
      _
    $region43: #{tpu_custom_call.1} parent=1 // pred_check_branch
      %230 = sbr.rel (0) target = $region45
    $region44: #{tpu_custom_call.1} parent=1 // pred_region
      _
    $region45: #{tpu_custom_call.1} parent=1 // pred_fallthru
      _
    // Predicated region
    $region46: #{tpu_custom_call.1} parent=1 // pred_check
      _
    $region47: #{tpu_custom_call.1} parent=1 // pred_check_branch
      %232 = sbr.rel (0) target = $region49
    $region48: #{tpu_custom_call.1} parent=1 // pred_region
      %234 = dma.done [#allocation4], 128
    $region49: #{tpu_custom_call.1} parent=1 // pred_fallthru
      _
    // Predicated region
    $region50: #{tpu_custom_call.1} parent=1 // pred_check
      _
    $region51: #{tpu_custom_call.1} parent=1 // pred_check_branch
      %236 = sbr.rel (0) target = $region53
    $region52: #{tpu_custom_call.1} parent=1 // pred_region
      _
    $region53: #{tpu_custom_call.1} parent=1 // pred_fallthru
      _
    %237 = vsyncpa [#allocation4], 1

</llo_original>
